<compile_context>
chip_gen: v7x
topology: tpu7x:2x2x1
jax: 0.10.0
libtpu: 0.0.40
codegen_flags: <defaults>
</compile_context>

<pallas_src>
import functools
import math

import jax
import jax.numpy as jnp
from jax.experimental import pallas as pl
from jax.experimental.pallas import tpu as pltpu


# ----------------------------- helpers -----------------------------

def _pick_tile(dim, target, align):
    """Largest multiple of `align` that divides `dim` and is <= `target`.
    Falls back to the full dimension (always a legal BlockSpec extent)."""
    if dim <= target:
        return dim
    t = (target // align) * align
    while t >= align:
        if dim % t == 0:
            return t
        t -= align
    return dim


@functools.lru_cache(maxsize=1)
def _vmem_limit():
    """Per-generation VMEM budget: ~3/4 of physical, clamped to [32, 96] MiB."""
    cap = 128 * 1024 * 1024
    try:
        cap = int(getattr(pltpu.get_tpu_info(), "vmem_capacity_bytes", cap))
    except Exception:
        pass
    return min(96 * 1024 * 1024, max(32 * 1024 * 1024, (cap * 3) // 4))


# ----------------------------- tiled linear kernel -----------------------------

def _linear_kernel(*refs, activation, has_residual):
    if has_residual:
        x_ref, w_ref, b_ref, r_ref, o_ref, acc_ref = refs
    else:
        x_ref, w_ref, b_ref, o_ref, acc_ref = refs
        r_ref = None

    @pl.when(pl.program_id(2) == 0)
    def _init():
        acc_ref[...] = jnp.zeros_like(acc_ref)

    # bf16 operands on the MXU, f32 accumulation.
    acc_ref[...] += jnp.dot(x_ref[...].astype(jnp.bfloat16),
                            w_ref[...].astype(jnp.bfloat16),
                            preferred_element_type=jnp.float32)

    @pl.when(pl.program_id(2) == pl.num_programs(2) - 1)
    def _finalize():
        y = acc_ref[...] + b_ref[...].astype(jnp.float32)
        if activation == "gelu":
            # exact (erf-based) GELU, matching torch.nn.GELU() default, in f32
            y = 0.5 * y * (1.0 + jax.lax.erf(y * (1.0 / math.sqrt(2.0))))
        if r_ref is not None:
            y = y + r_ref[...].astype(jnp.float32)
        o_ref[...] = y.astype(o_ref.dtype)


def linear(x2d, w, b, *, residual=None, activation=None, out_dtype=None,
           tm=512, tn=512, tk=512):
    """y = act(x @ w + b) [+ residual], tiled and pipelined on the MXU."""
    m, k = x2d.shape
    k2, n = w.shape
    assert k == k2
    out_dtype = out_dtype or x2d.dtype
    tm = _pick_tile(m, tm, 16)    # 16-row alignment for bf16 sublane packing
    tn = _pick_tile(n, tn, 128)
    tk = _pick_tile(k, tk, 128)
    grid = (m // tm, n // tn, k // tk)

    in_specs = [
        pl.BlockSpec((tm, tk), lambda i, j, kk: (i, kk)),
        pl.BlockSpec((tk, tn), lambda i, j, kk: (kk, j)),
        pl.BlockSpec((1, tn), lambda i, j, kk: (0, j)),
    ]
    args = [x2d, w, b.reshape(1, n)]
    bytes_accessed = (x2d.size * x2d.dtype.itemsize + w.size * w.dtype.itemsize
                      + b.size * b.dtype.itemsize
                      + m * n * jnp.dtype(out_dtype).itemsize)
    if residual is not None:
        in_specs.append(pl.BlockSpec((tm, tn), lambda i, j, kk: (i, j)))
        args.append(residual)
        bytes_accessed += residual.size * residual.dtype.itemsize

    kern = functools.partial(_linear_kernel, activation=activation,
                             has_residual=residual is not None)
    cost = pl.CostEstimate(
        flops=2 * m * n * k,
        transcendentals=m * n if activation == "gelu" else 0,
        bytes_accessed=bytes_accessed)
    return pl.pallas_call(
        kern,
        out_shape=jax.ShapeDtypeStruct((m, n), out_dtype),
        grid=grid,
        in_specs=in_specs,
        out_specs=pl.BlockSpec((tm, tn), lambda i, j, kk: (i, j)),
        scratch_shapes=[pltpu.VMEM((tm, tn), jnp.float32)],
        compiler_params=pltpu.CompilerParams(
            dimension_semantics=("parallel", "parallel", "arbitrary"),
            vmem_limit_bytes=_vmem_limit()),
        cost_estimate=cost,
    )(*args)


# ----------------------------- layernorm kernel -----------------------------
# TODO(synk): fuse LN fully into the consumer GEMM (per-row mean/rstd applied
# on the x block in the GEMM prologue) to remove this HBM round-trip.

def _layernorm_kernel(x_ref, g_ref, b_ref, o_ref):
    x = x_ref[...].astype(jnp.float32)
    mean = jnp.mean(x, axis=-1, keepdims=True)
    var = jnp.mean(jnp.square(x - mean), axis=-1, keepdims=True)
    y = (x - mean) * jax.lax.rsqrt(var + 1e-5)          # eps matches nn.LayerNorm
    o_ref[...] = (y * g_ref[...] + b_ref[...]).astype(o_ref.dtype)


def layernorm(x, gamma, beta, *, tm=512, out_dtype=jnp.bfloat16):
    b, s, d = x.shape
    m = b * s
    tm = _pick_tile(m, tm, 16)
    y = pl.pallas_call(
        _layernorm_kernel,
        out_shape=jax.ShapeDtypeStruct((m, d), out_dtype),
        grid=(m // tm,),
        in_specs=[pl.BlockSpec((tm, d), lambda i: (i, 0)),
                  pl.BlockSpec((1, d), lambda i: (0, 0)),
                  pl.BlockSpec((1, d), lambda i: (0, 0))],
        out_specs=pl.BlockSpec((tm, d), lambda i: (i, 0)),
        compiler_params=pltpu.CompilerParams(
            dimension_semantics=("parallel",),
            vmem_limit_bytes=_vmem_limit()),
    )(x.reshape(m, d), gamma.reshape(1, d), beta.reshape(1, d))
    return y.reshape(b, s, d)


# ----------------------------- flash attention kernel -----------------------------

def _flash_kernel(q_ref, k_ref, v_ref, bias_ref, o_ref, m_ref, l_ref, acc_ref,
                  *, inv_scale):
    ki = pl.program_id(3)

    @pl.when(ki == 0)
    def _init():
        m_ref[...] = jnp.full_like(m_ref, -jnp.inf)
        l_ref[...] = jnp.zeros_like(l_ref)
        acc_ref[...] = jnp.zeros_like(acc_ref)

    # 1/sqrt(Dh) folded into q (tq*Dh muls instead of tq*tk); bf16 MXU operands.
    q = q_ref[0, 0] * inv_scale                                  # [tq, Dh] bf16
    s = jax.lax.dot_general(q, k_ref[0, 0], (((1,), (1,)), ((), ())),
                            preferred_element_type=jnp.float32)  # [tq, tk] f32
    # additive mask bias (-1e30 on masked entries): large finite negative, so
    # fully-masked rows give a uniform softmax instead of NaN (intentional
    # divergence from torch's -inf fill).
    s = s + bias_ref[0].astype(jnp.float32)

    m_prev = m_ref[...]
    m_new = jnp.maximum(m_prev, jnp.max(s, axis=-1, keepdims=True))
    alpha = jnp.exp(m_prev - m_new)                              # f32 on EUP
    p = jnp.exp(s - m_new)
    l_ref[...] = alpha * l_ref[...] + jnp.sum(p, axis=-1, keepdims=True)
    acc_ref[...] = alpha * acc_ref[...] + jnp.dot(
        p.astype(v_ref.dtype), v_ref[0, 0], preferred_element_type=jnp.float32)
    m_ref[...] = m_new

    @pl.when(ki == pl.num_programs(3) - 1)
    def _finalize():
        o_ref[0, 0] = (acc_ref[...] *
                       pl.reciprocal(l_ref[...], approx=True)).astype(o_ref.dtype)


def flash_attention(q, k, v, bias, *, tq=256, tk=512):
    """q/k/v: [B, H, S, Dh] bf16; bias: [B, Sq, Sk] additive bf16 mask bias."""
    b, h, sq, dh = q.shape
    sk = k.shape[2]
    tq = _pick_tile(sq, tq, 16)
    tk = _pick_tile(sk, tk, 128)
    grid = (b, h, sq // tq, sk // tk)
    kern = functools.partial(_flash_kernel, inv_scale=1.0 / math.sqrt(dh))
    return pl.pallas_call(
        kern,
        out_shape=jax.ShapeDtypeStruct((b, h, sq, dh), jnp.bfloat16),
        grid=grid,
        in_specs=[
            pl.BlockSpec((1, 1, tq, dh), lambda bi, hi, qi, ki: (bi, hi, qi, 0)),
            pl.BlockSpec((1, 1, tk, dh), lambda bi, hi, qi, ki: (bi, hi, ki, 0)),
            pl.BlockSpec((1, 1, tk, dh), lambda bi, hi, qi, ki: (bi, hi, ki, 0)),
            pl.BlockSpec((1, tq, tk), lambda bi, hi, qi, ki: (bi, qi, ki)),
        ],
        out_specs=pl.BlockSpec((1, 1, tq, dh), lambda bi, hi, qi, ki: (bi, hi, qi, 0)),
        scratch_shapes=[pltpu.VMEM((tq, 1), jnp.float32),
                        pltpu.VMEM((tq, 1), jnp.float32),
                        pltpu.VMEM((tq, dh), jnp.float32)],
        compiler_params=pltpu.CompilerParams(
            dimension_semantics=("parallel", "parallel", "parallel", "arbitrary"),
            vmem_limit_bytes=_vmem_limit()),
    )(q, k, v, bias)


# ----------------------------- model pieces -----------------------------

def mha_self(x, bias, p, num_heads, dim_head, residual):
    b, s, d = x.shape
    # fused [D, 3D] QKV projection: activations read from HBM once
    qkv = linear(x.reshape(b * s, d), p["wqkv"], p["bqkv"], out_dtype=jnp.bfloat16)
    qkv = jnp.transpose(qkv.reshape(b, s, 3, num_heads, dim_head),
                        (2, 0, 3, 1, 4))                  # [3, B, H, S, Dh]
    attn = flash_attention(qkv[0], qkv[1], qkv[2], bias)  # [B, H, S, Dh] bf16
    attn = jnp.transpose(attn, (0, 2, 1, 3)).reshape(b * s, d)
    # fc_concat with the residual add fused into the epilogue
    out = linear(attn, p["wo"], p["bo"],
                 residual=residual.reshape(b * s, d), out_dtype=jnp.float32)
    return out.reshape(b, s, d)


def mha_cross(x_q, enc_bf16, bias, p, num_heads, dim_head, residual):
    b, sq, d = x_q.shape
    sk = enc_bf16.shape[1]
    q = linear(x_q.reshape(b * sq, d), p["wq"], p["bq"], out_dtype=jnp.bfloat16)
    q = jnp.transpose(q.reshape(b, sq, num_heads, dim_head), (0, 2, 1, 3))
    kv = linear(enc_bf16.reshape(b * sk, d), p["wkv"], p["bkv"],
                out_dtype=jnp.bfloat16)
    kv = jnp.transpose(kv.reshape(b, sk, 2, num_heads, dim_head), (2, 0, 3, 1, 4))
    attn = flash_attention(q, kv[0], kv[1], bias)
    attn = jnp.transpose(attn, (0, 2, 1, 3)).reshape(b * sq, d)
    out = linear(attn, p["wo"], p["bo"],
                 residual=residual.reshape(b * sq, d), out_dtype=jnp.float32)
    return out.reshape(b, sq, d)


def decoder_layer(x, dec_bias, enc_dec_bias, enc_bf16, lp, num_heads, dim_head):
    b, s, d = x.shape
    ln1 = layernorm(x, lp["ln1_g"], lp["ln1_b"])
    res1 = mha_self(ln1, dec_bias, lp["masked_attn"], num_heads, dim_head, residual=x)
    ln2 = layernorm(res1, lp["ln2_g"], lp["ln2_b"])
    # NOTE: reference adds `x` (layer input), not res1 — reproduced exactly.
    res2 = mha_cross(ln2, enc_bf16, enc_dec_bias, lp["enc_dec_attn"],
                     num_heads, dim_head, residual=x)
    ln3 = layernorm(res2, lp["ln3_g"], lp["ln3_b"])
    h = linear(ln3.reshape(b * s, d), lp["ffn_w1"], lp["ffn_b1"],
               activation="gelu", out_dtype=jnp.bfloat16)
    # second FFN linear with the residual add fused into the epilogue
    out = linear(h, lp["ffn_w2"], lp["ffn_b2"],
                 residual=res2.reshape(b * s, d), out_dtype=jnp.float32)
    return out.reshape(b, s, d)


def decoder_forward(params, inputs, dec_mask, enc_dec_mask, enc_output,
                    *, max_seq, num_heads, dim_head):
    b, s, d = inputs.shape
    # reference: pos_x = arange(max_seq).repeat(B) -> [B*max_seq]; broadcast add
    # only works when B*max_seq == S, which we require of the inputs.
    assert b * max_seq == s, "reference positional-embedding broadcast requires B*max_seq == S"
    pos_idx = jnp.tile(jnp.arange(max_seq), b)              # [B*max_seq]
    pos = params["pos_emb"][pos_idx]                        # [S, D]
    # TODO(synk): reference uses torch.sqrt(torch.Tensor(dim_model)) — an
    # uninitialized (dim_model,)-vector; we use the intended scalar sqrt(D).
    x = math.sqrt(d) * inputs + pos                         # [B,S,D] f32

    # masks -> compact additive bf16 biases, computed once and reused by every layer
    neg = jnp.float32(-1e30)
    dec_bias = jnp.where(dec_mask == 0, neg, 0.0).astype(jnp.bfloat16)
    enc_dec_bias = jnp.where(enc_dec_mask == 0, neg, 0.0).astype(jnp.bfloat16)
    enc_bf16 = enc_output.astype(jnp.bfloat16)              # cast once, read per layer

    layer_outputs = []
    for lp in params["layers"]:
        x = decoder_layer(x, dec_bias, enc_dec_bias, enc_bf16, lp,
                          num_heads, dim_head)
        layer_outputs.append(x)
    ln = layernorm(x, params["lnf_g"], params["lnf_b"])
    vocab = params["fc_out_w"].shape[1]
    decoded = linear(ln.reshape(b * s, d), params["fc_out_w"],
                     params["fc_out_b"], out_dtype=jnp.float32).reshape(b, s, vocab)
    return decoded, jnp.stack(layer_outputs, axis=0)


# ----------------------------- parameter init -----------------------------

def make_decoder_params(key, vocab_size, max_seq, n_layers, dim_model, dim_ffn):
    keys = iter(jax.random.split(key, 512))
    wdt = jnp.bfloat16   # MXU-native weight storage (halves weight DMA bytes)

    def nrm(shape, std=0.02, dtype=jnp.float32):
        return (std * jax.random.normal(next(keys), shape)).astype(dtype)

    def mha_params():
        wq, wk, wv = (nrm((dim_model, dim_model)), nrm((dim_model, dim_model)),
                      nrm((dim_model, dim_model)))
        bq, bk, bv = nrm((dim_model,)), nrm((dim_model,)), nrm((dim_model,))
        return {
            # fused forms (self-attention uses wqkv; enc-dec uses wq + wkv)
            "wqkv": jnp.concatenate([wq, wk, wv], axis=1).astype(wdt),
            "bqkv": jnp.concatenate([bq, bk, bv]),
            "wq": wq.astype(wdt), "bq": bq,
            "wkv": jnp.concatenate([wk, wv], axis=1).astype(wdt),
            "bkv": jnp.concatenate([bk, bv]),
            "wo": nrm((dim_model, dim_model), dtype=wdt), "bo": nrm((dim_model,)),
        }

    ones = jnp.ones((dim_model,), jnp.float32)
    zeros = jnp.zeros((dim_model,), jnp.float32)
    layers = []
    for _ in range(n_layers):
        layers.append({
            "masked_attn": mha_params(),
            "enc_dec_attn": mha_params(),
            "ln1_g": ones, "ln1_b": zeros,
            "ln2_g": ones, "ln2_b": zeros,
            "ln3_g": ones, "ln3_b": zeros,
            "ffn_w1": nrm((dim_model, dim_ffn), dtype=wdt), "ffn_b1": nrm((dim_ffn,)),
            "ffn_w2": nrm((dim_ffn, dim_model), dtype=wdt), "ffn_b2": nrm((dim_model,)),
        })
    return {
        "pos_emb": nrm((max_seq, dim_model), std=1.0),
        "layers": layers,
        "lnf_g": ones, "lnf_b": zeros,
        "fc_out_w": nrm((dim_model, vocab_size), dtype=wdt),
        "fc_out_b": nrm((vocab_size,)),
    }


# ----------------------------- main -----------------------------

if __name__ == "__main__":
    vocab_size = 16
    max_seq = 4
    n_layers = 2
    dim_model = 32
    num_heads = 4
    dim_head = dim_model // num_heads
    dim_ffn = 64
    B = 2
    S = B * max_seq  # = 8; required by the reference pos-embedding broadcast

    key = jax.random.PRNGKey(0)
    kp, ki, ke = jax.random.split(key, 3)
    params = make_decoder_params(kp, vocab_size, max_seq, n_layers, dim_model, dim_ffn)

    inputs = jax.random.normal(ki, (B, S, dim_model), jnp.float32)
    enc_output = jax.random.normal(ke, (B, S, dim_model), jnp.float32)
    dec_mask = jnp.tile(jnp.tril(jnp.ones((S, S), jnp.int32))[None], (B, 1, 1))
    enc_dec_mask = jnp.ones((B, S, S), jnp.int32).at[:, :, -2:].set(0)

    decoded_x, layer_output = decoder_forward(
        params, inputs, dec_mask, enc_dec_mask, enc_output,
        max_seq=max_seq, num_heads=num_heads, dim_head=dim_head)

    jax.block_until_ready((decoded_x, layer_output))
    assert decoded_x.shape == (B, S, vocab_size)
    assert layer_output.shape == (n_layers, B, S, dim_model)
    print("KERNEL_OK")
</pallas_src>

<mosaic_0001>
module attributes {stable_mosaic.version = 11 : i64} {
  func.func @_layernorm_kernel(%arg0: i32, %arg1: memref<16x32xf32, #tpu.memory_space<vmem>>, %arg2: memref<1x32xf32, #tpu.memory_space<vmem>>, %arg3: memref<1x32xf32, #tpu.memory_space<vmem>>, %arg4: memref<16x32xbf16, #tpu.memory_space<vmem>>) attributes {dimension_semantics = [#tpu.dimension_semantics<parallel>], iteration_bounds = array<i64: 1>, scalar_prefetch = 0 : i64, scratch_operands = 0 : i64, tpu.core_type = #tpu.core_type<tc>, window_params = [{transform_indices = @transform_0, window_bounds = array<i64: 16, 32>}, {pipeline_mode = #tpu.pipeline_mode<synchronous>, transform_indices = @transform_1, window_bounds = array<i64: 1, 32>}, {pipeline_mode = #tpu.pipeline_mode<synchronous>, transform_indices = @transform_2, window_bounds = array<i64: 1, 32>}, {transform_indices = @transform_3, window_bounds = array<i64: 16, 32>}]} {
    %c0 = arith.constant 0 : index
    %c0_0 = arith.constant 0 : index
    %0 = vector.load %arg1[%c0, %c0_0] : memref<16x32xf32, #tpu.memory_space<vmem>>, vector<16x32xf32>
    %cst = arith.constant dense<0.000000e+00> : vector<16xf32>
    %1 = vector.multi_reduction <add>, %0, %cst [1] : vector<16x32xf32> to vector<16xf32>
    %2 = vector.shape_cast %1 : vector<16xf32> to vector<16x1xf32>
    %cst_1 = arith.constant 3.200000e+01 : f32
    %3 = vector.broadcast %cst_1 : f32 to vector<16x1xf32>
    %4 = arith.divf %2, %3 : vector<16x1xf32>
    %5 = vector.broadcast %4 : vector<16x1xf32> to vector<16x32xf32>
    %6 = arith.subf %0, %5 : vector<16x32xf32>
    %7 = arith.mulf %6, %6 : vector<16x32xf32>
    %cst_2 = arith.constant dense<0.000000e+00> : vector<16xf32>
    %8 = vector.multi_reduction <add>, %7, %cst_2 [1] : vector<16x32xf32> to vector<16xf32>
    %9 = vector.shape_cast %8 : vector<16xf32> to vector<16x1xf32>
    %cst_3 = arith.constant 3.200000e+01 : f32
    %10 = vector.broadcast %cst_3 : f32 to vector<16x1xf32>
    %11 = arith.divf %9, %10 : vector<16x1xf32>
    %12 = vector.broadcast %4 : vector<16x1xf32> to vector<16x32xf32>
    %13 = arith.subf %0, %12 : vector<16x32xf32>
    %cst_4 = arith.constant 9.99999974E-6 : f32
    %14 = vector.broadcast %cst_4 : f32 to vector<16x1xf32>
    %15 = arith.addf %11, %14 : vector<16x1xf32>
    %16 = math.rsqrt %15 : vector<16x1xf32>
    %17 = vector.broadcast %16 : vector<16x1xf32> to vector<16x32xf32>
    %18 = arith.mulf %13, %17 : vector<16x32xf32>
    %c0_5 = arith.constant 0 : index
    %c0_6 = arith.constant 0 : index
    %19 = vector.load %arg2[%c0_5, %c0_6] : memref<1x32xf32, #tpu.memory_space<vmem>>, vector<1x32xf32>
    %20 = vector.broadcast %19 : vector<1x32xf32> to vector<16x32xf32>
    %21 = arith.mulf %18, %20 : vector<16x32xf32>
    %c0_7 = arith.constant 0 : index
    %c0_8 = arith.constant 0 : index
    %22 = vector.load %arg3[%c0_7, %c0_8] : memref<1x32xf32, #tpu.memory_space<vmem>>, vector<1x32xf32>
    %23 = vector.broadcast %22 : vector<1x32xf32> to vector<16x32xf32>
    %24 = arith.addf %21, %23 : vector<16x32xf32>
    %25 = arith.truncf %24 : vector<16x32xf32> to vector<16x32xbf16>
    %c0_9 = arith.constant 0 : index
    %c0_10 = arith.constant 0 : index
    %26 = vector.load %arg4[%c0_9, %c0_10] : memref<16x32xbf16, #tpu.memory_space<vmem>>, vector<16x32xbf16>
    tpu.vector_store %arg4[%c0_9, %c0_10], %25 {strides = array<i32>} : memref<16x32xbf16, #tpu.memory_space<vmem>>, vector<16x32xbf16>,
    return
  }
  func.func @transform_0(%arg0: i32) -> (i32, i32) {
    %c0_i32 = arith.constant 0 : i32
    %c0_i32_0 = arith.constant 0 : i32
    return %arg0, %c0_i32 : i32, i32
  }
  func.func @transform_1(%arg0: i32) -> (i32, i32) {
    %c0_i32 = arith.constant 0 : i32
    %c0_i32_0 = arith.constant 0 : i32
    %c0_i32_1 = arith.constant 0 : i32
    return %c0_i32, %c0_i32_0 : i32, i32
  }
  func.func @transform_2(%arg0: i32) -> (i32, i32) {
    %c0_i32 = arith.constant 0 : i32
    %c0_i32_0 = arith.constant 0 : i32
    %c0_i32_1 = arith.constant 0 : i32
    return %c0_i32, %c0_i32_0 : i32, i32
  }
  func.func @transform_3(%arg0: i32) -> (i32, i32) {
    %c0_i32 = arith.constant 0 : i32
    %c0_i32_0 = arith.constant 0 : i32
    return %arg0, %c0_i32 : i32, i32
  }
}

</mosaic_0001>

<llo_original>
// kernel: tpu_custom_call.1
$region0: #{tpu_custom_call.1}
  #allocation0 [shape = 'u32[]', space=smem, size = 0x4, offset = 0x4, fixed_abs, tag = 'smem constant byte address 0x4 - core index']
  #allocation1 [shape = 'u32[144,128]{1,0:T(1,128)}', space=vmem, size = 0x12000, scoped, tag = 'internal scratch']
  %s0 = inlined_call_operand.hbm [shape: f32[16,32], index: 0, kind: input, shape index: {}]
  %s1 = inlined_call_operand.hbm [shape: f32[1,32], index: 1, kind: input, shape index: {}]
  %s2 = inlined_call_operand.hbm [shape: f32[1,32], index: 2, kind: input, shape index: {}]
  %s3 = inlined_call_operand.hbm [shape: bf16[16,32], index: 3, kind: output, shape index: {}]
  %s4 = sld [smem:[#allocation0]]
  $region34: #{tpu_custom_call.1} parent=0
    _
  %s6 = ssub.s32 1, %s4
  %s7 = scalar_select 0, %s6, %s4
  $region1: #{tpu_custom_call.1} parent=0
    #allocation2 [shape = 'u8[8192]{0}', space=vmem, size = 0x2000, scoped, tag = 'input window, operand 0, single buffered']
    #allocation3 [shape = 's32[1]{0}', space=sflag, size = 0x4, scoped, tag = 'scoped memory for tpu_custom_call.1']
    #allocation4 [shape = 's32[1]{0}', space=sflag, size = 0x4, scoped, tag = 'scoped memory for tpu_custom_call.1']
    #allocation5 [shape = 'u8[512]{0}', space=vmem, size = 0x400, scoped, tag = 'input window, operand 1, single buffered']
    #allocation6 [shape = 's32[1]{0}', space=sflag, size = 0x4, scoped, tag = 'scoped memory for tpu_custom_call.1']
    #allocation7 [shape = 'u8[512]{0}', space=vmem, size = 0x400, scoped, tag = 'input window, operand 2, single buffered']
    #allocation8 [shape = 'u8[4096]{0}', space=vmem, size = 0x1000, scoped, tag = 'output window, operand 0, single buffered']
    %8 = vsyncpa [#allocation3], 0
    %9 = vsyncpa [#allocation6], 0
    %10 = vsyncpa [#allocation4], 0
    // Predicated region
    $region2: #{tpu_custom_call.1} parent=1 // pred_check
      _
    $region3: #{tpu_custom_call.1} parent=1 // pred_check_branch
      %12 = sbr.rel (0) target = $region5
    $region4: #{tpu_custom_call.1} parent=1 // pred_region
      %s14 = ssub.s32 256, 256
      %15 = vsyncadd [#allocation3], %s14
      %s16 = sshll.u32 [#allocation2], 4
      %s17 = int_to_ptr.vmem [resolvable:$true] %s16
      %22 = dma.hbm_to_vmem [thread:$0]  %s0, 256, %s17, [#allocation3], 128, 128, 8
    $region5: #{tpu_custom_call.1} parent=1 // pred_fallthru
      _
    // Predicated region
    $region6: #{tpu_custom_call.1} parent=1 // pred_check
      _
    $region7: #{tpu_custom_call.1} parent=1 // pred_check_branch
      %24 = sbr.rel (0) target = $region9
    $region8: #{tpu_custom_call.1} parent=1 // pred_region
      %s26 = ssub.s32 16, 16
      %27 = vsyncadd [#allocation6], %s26
      %s29 = sshll.u32 [#allocation5], 4
      %s30 = int_to_ptr.vmem [resolvable:$true] %s29
      %32 = dma.hbm_to_vmem [thread:$0]  %s1, 16, %s30, [#allocation6]
    $region9: #{tpu_custom_call.1} parent=1 // pred_fallthru
      _
    // Predicated region
    $region10: #{tpu_custom_call.1} parent=1 // pred_check
      _
    $region11: #{tpu_custom_call.1} parent=1 // pred_check_branch
      %34 = sbr.rel (0) target = $region13
    $region12: #{tpu_custom_call.1} parent=1 // pred_region
      %s36 = ssub.s32 16, 16
      %37 = vsyncadd [#allocation6], %s36
      %s39 = sshll.u32 [#allocation7], 4
      %s40 = int_to_ptr.vmem [resolvable:$true] %s39
      %42 = dma.hbm_to_vmem [thread:$0]  %s2, 16, %s40, [#allocation6]
    $region13: #{tpu_custom_call.1} parent=1 // pred_fallthru
      _
    // Predicated region
    $region14: #{tpu_custom_call.1} parent=1 // pred_check
      _
    $region15: #{tpu_custom_call.1} parent=1 // pred_check_branch
      %44 = sbr.rel (0) target = $region17
    $region16: #{tpu_custom_call.1} parent=1 // pred_region
      %45 = dma.done [#allocation3], 256
    $region17: #{tpu_custom_call.1} parent=1 // pred_fallthru
      _
    // Predicated region
    $region18: #{tpu_custom_call.1} parent=1 // pred_check
      _
    $region19: #{tpu_custom_call.1} parent=1 // pred_check_branch
      %47 = sbr.rel (0) target = $region21
    $region20: #{tpu_custom_call.1} parent=1 // pred_region
      %48 = dma.done [#allocation6], 16
    $region21: #{tpu_custom_call.1} parent=1 // pred_fallthru
      _
    // Predicated region
    $region22: #{tpu_custom_call.1} parent=1 // pred_check
      _
    $region23: #{tpu_custom_call.1} parent=1 // pred_check_branch
      %50 = sbr.rel (0) target = $region25
    $region24: #{tpu_custom_call.1} parent=1 // pred_region
      %51 = dma.done [#allocation6], 16
    $region25: #{tpu_custom_call.1} parent=1 // pred_fallthru
      _
    %v52 = vld [vmem:[#allocation2] sm:$0xff]
    %v53 = vld [vmem:[#allocation2 + $0x8] sm:$0xff]
    %vm54 = vcmask 261120
    %v55 = vsel %vm54, %v52, 0.0
    %56 = vadd.xlane.f32.xlu0 %v55
    %v57 = vpop.xlane.xlu0 %56
    %v58 = vsel %vm54, %v53, 0.0
    %59 = vadd.xlane.f32.xlu0 %v58
    %v60 = vpop.xlane.xlu0 %59
    %v61 = vrcp.pop 32.0
    %v62 = vmul.f32 %v57, %v61
    %v63 = vmul.f32 %v60, %v61
    %v64 = vsub.f32 %v52, %v62
    %v65 = vsub.f32 %v53, %v63
    %v66 = vmul.f32 %v64, %v64
    %v67 = vmul.f32 %v65, %v65
    %v68 = vsel %vm54, %v66, 0.0
    %69 = vadd.xlane.f32.xlu0 %v68
    %v70 = vpop.xlane.xlu0 %69
    %v71 = vsel %vm54, %v67, 0.0
    %72 = vadd.xlane.f32.xlu0 %v71
    %v73 = vpop.xlane.xlu0 %72
    %v74 = vmul.f32 %v70, %v61
    %v75 = vmul.f32 %v73, %v61
    %v76 = vadd.f32 %v74, 1e-05
    %v77 = vadd.f32 %v75, 1e-05
    %v78 = vrsqrt.pop %v76
    %v79 = vrsqrt.pop %v77
    %v80 = vmul.f32 %v64, %v78
    %v81 = vmul.f32 %v65, %v79
    %v82 = vld [vmem:[#allocation5] sm:$0x1]
    %v84 = vlaneseq
    %v85 = vshrl.u32 %v84, 7
    %v86 = vsub.s32 0, %v85
    %v87 = vrot.slane %v82, %v86
    %v89 = vmul.f32 %v80, %v87
    %v90 = vmul.f32 %v81, %v87
    %v91 = vld [vmem:[#allocation7] sm:$0x1]
    %v93 = vlaneseq
    %v94 = vshrl.u32 %v93, 7
    %v95 = vsub.s32 0, %v94
    %v96 = vrot.slane %v91, %v95
    %v98 = vadd.f32 %v89, %v96
    %v99 = vadd.f32 %v90, %v96
    %v100 = vpack.c.bf16 %v99, %v98
    %v102 = vunpack.c.l.b16 %v100
    %v103 = vunpack.c.h.b16 %v100
    %v104 = vpack.c.b16 %v102, %v102
    %v105 = vpack.c.b16 %v103, %v103
    %vm108 = vcmask 257024
    %109 = vst.msk [vmem:[#allocation8] sm:$0xf] %vm108, %v104
    %110 = vst.msk [vmem:[#allocation8 + $0x4] sm:$0xf] %vm108, %v105
    // Predicated region
    $region26: #{tpu_custom_call.1} parent=1 // pred_check
      _
    $region27: #{tpu_custom_call.1} parent=1 // pred_check_branch
      %112 = sbr.rel (0) target = $region29
    $region28: #{tpu_custom_call.1} parent=1 // pred_region
      %s114 = ssub.s32 128, 128
      %115 = vsyncadd [#allocation4], %s114
      %s116 = sshll.u32 [#allocation8], 4
      %s117 = int_to_ptr.vmem [resolvable:$true] %s116
      %122 = dma.vmem_to_hbm [thread:$0]  %s117, 128, %s3, [#allocation4], 64, 64, 4
    $region29: #{tpu_custom_call.1} parent=1 // pred_fallthru
      _
    // Predicated region
    $region30: #{tpu_custom_call.1} parent=1 // pred_check
      _
    $region31: #{tpu_custom_call.1} parent=1 // pred_check_branch
      %124 = sbr.rel (0) target = $region33
    $region32: #{tpu_custom_call.1} parent=1 // pred_region
      %125 = dma.done [#allocation4], 128
    $region33: #{tpu_custom_call.1} parent=1 // pred_fallthru
      _
    %126 = vsyncpa [#allocation3], 1
    %127 = vsyncpa [#allocation6], 1
    %128 = vsyncpa [#allocation4], 1

</llo_original>
